<compile_context>
chip_gen: v7x
topology: tpu7x:2x2x1
jax: 0.10.0
libtpu: 0.0.40
codegen_flags: <defaults>
</compile_context>

<pallas_src>
import jax
import jax.numpy as jnp
from jax.experimental import pallas as pl
from jax.experimental.pallas import tpu as pltpu

K = 3        # conv kernel size
STRIDE = 2
PAD = 1


def _conv3d_sigmoid_kernel(p_ref, w_ref, b_ref, o_ref):
    # p_ref: (KC, TM)    im2col patch slab, lane-dense in M
    # w_ref: (Cout, KC)  packed weights, rows ordered (kd, kh, kw, cin)
    # b_ref: (Cout, 1)
    # o_ref: (Cout, TM)  channel-major output block (lane-dense in M)
    acc = jnp.dot(w_ref[...], p_ref[...],
                  preferred_element_type=jnp.float32)        # (Cout, TM) on the MXU
    acc = acc + b_ref[...]                                   # broadcast over lanes
    o_ref[...] = jax.nn.sigmoid(acc).astype(o_ref.dtype)


def _num_tensorcores():
    """TensorCores reachable by one pallas_call ('parallel' grid axes shard
    across them): 2 on v7x and on megacore chips (v4/v5p), else 1."""
    try:
        kind = jax.devices()[0].device_kind.lower()
    except Exception:
        return 1
    if ("v7" in kind) or ("v4" in kind) or ("v5p" in kind):
        return 2
    return 1


def _pick_tm(M, min_blocks):
    """Largest multiple-of-128 tile dividing M, with at least `min_blocks`
    tiles so every available TensorCore gets work; otherwise the largest
    legal tile; otherwise the full extent (legal, but masked stores)."""
    candidates = (8192, 4096, 2048, 1024, 512, 256, 128)
    for tm in candidates:
        if M % tm == 0 and M // tm >= min_blocks:
            return tm
    for tm in candidates:
        if M % tm == 0:
            return tm
    return M


def conv3d_sigmoid(x_ncdhw, w, b):
    """x_ncdhw: (N, Cin, D, H, W); w: (K, K, K, Cin, Cout); b: (Cout,)."""
    N, Cin, D, H, W = x_ncdhw.shape
    Cout = w.shape[-1]
    Do = (D + 2 * PAD - K) // STRIDE + 1
    Ho = (H + 2 * PAD - K) // STRIDE + 1
    Wo = (W + 2 * PAD - K) // STRIDE + 1
    M = Do * Ho * Wo
    KC = K * K * K * Cin

    # --- layout plumbing (plain XLA): build the im2col slab DIRECTLY in
    # (N, KC, M) order from the padded NCDHW tensor.  No transposes: the tap
    # slices are strided reads, the stack + reshape are contiguous merges.
    xp = jnp.pad(x_ncdhw, ((0, 0), (0, 0), (PAD, PAD), (PAD, PAD), (PAD, PAD)))
    taps = []
    for kd in range(K):
        for kh in range(K):
            for kw in range(K):
                t = xp[:, :, kd:kd + STRIDE * Do:STRIDE,
                             kh:kh + STRIDE * Ho:STRIDE,
                             kw:kw + STRIDE * Wo:STRIDE]      # (N, Cin, Do, Ho, Wo)
                taps.append(t.reshape(N, Cin, M))
    p = jnp.stack(taps, axis=1).reshape(N, KC, M)             # rows = (kd, kh, kw, cin)

    w_packed = w.reshape(KC, Cout).T                          # (Cout, KC), same row order
    b2 = b.reshape(Cout, 1)

    TM = _pick_tm(M, min_blocks=_num_tensorcores())
    grid = (N, pl.cdiv(M, TM))

    cost = pl.CostEstimate(
        flops=2 * N * Cout * KC * M,
        transcendentals=N * Cout * M,                         # sigmoid -> exp
        bytes_accessed=4 * (N * KC * M + Cout * KC + Cout + N * Cout * M),
    )

    out = pl.pallas_call(
        _conv3d_sigmoid_kernel,
        out_shape=jax.ShapeDtypeStruct((N, Cout, M), x_ncdhw.dtype),
        grid_spec=pltpu.PrefetchScalarGridSpec(
            num_scalar_prefetch=0,
            grid=grid,
            in_specs=[
                pl.BlockSpec((None, KC, TM), lambda n, m: (n, 0, m)),  # patch slab
                pl.BlockSpec((Cout, KC), lambda n, m: (0, 0)),         # weights (resident)
                pl.BlockSpec((Cout, 1), lambda n, m: (0, 0)),          # bias (resident)
            ],
            out_specs=pl.BlockSpec((None, Cout, TM), lambda n, m: (n, 0, m)),
        ),
        compiler_params=pltpu.CompilerParams(
            dimension_semantics=("parallel", "parallel"),
            vmem_limit_bytes=32 * 1024 * 1024,
        ),
        cost_estimate=cost,
    )(p, w_packed, b2)

    # Already channel-major: NCDHW output is a free reshape (no transpose).
    return out.reshape(N, Cout, Do, Ho, Wo)


if __name__ == "__main__":
    key = jax.random.PRNGKey(0)
    kx, kw, kb = jax.random.split(key, 3)

    # Small shapes consistent with the module: Conv3d(5 -> 5), 3^3 kernel, stride 2, pad 1.
    N, C, D, H, W = 1, 5, 16, 16, 16
    x1 = jax.random.normal(kx, (N, C, D, H, W), dtype=jnp.float32)

    # Deterministic synthetic parameters (weight stored as (kd, kh, kw, Cin, Cout)).
    w = 0.1 * jax.random.normal(kw, (K, K, K, C, C), dtype=jnp.float32)
    b = 0.1 * jax.random.normal(kb, (C,), dtype=jnp.float32)

    fn = jax.jit(conv3d_sigmoid)
    out = jax.block_until_ready(fn(x1, w, b))
    assert out.shape == (N, C, D // 2, H // 2, W // 2), out.shape

    # Cross-check against XLA's conv (pure JAX reference).
    w_oidhw = jnp.transpose(w, (4, 3, 0, 1, 2))               # (Cout, Cin, kd, kh, kw)
    ref = jax.lax.conv_general_dilated(
        x1, w_oidhw, window_strides=(STRIDE,) * 3,
        padding=((PAD, PAD),) * 3,
        dimension_numbers=("NCDHW", "OIDHW", "NCDHW"))
    ref = jax.nn.sigmoid(ref + b.reshape(1, C, 1, 1, 1))
    assert jnp.allclose(out, ref, atol=2e-5, rtol=1e-5), float(jnp.max(jnp.abs(out - ref)))

    print("KERNEL_OK")
</pallas_src>

<mosaic_0001>
module attributes {stable_mosaic.version = 11 : i64} {
  func.func @_conv3d_sigmoid_kernel(%arg0: i32, %arg1: i32, %arg2: memref<1x135x512xf32, #tpu.memory_space<vmem>>, %arg3: memref<5x135xf32, #tpu.memory_space<vmem>>, %arg4: memref<5x1xf32, #tpu.memory_space<vmem>>, %arg5: memref<1x5x512xf32, #tpu.memory_space<vmem>>) attributes {dimension_semantics = [#tpu.dimension_semantics<parallel>, #tpu.dimension_semantics<parallel>], iteration_bounds = array<i64: 1, 1>, scalar_prefetch = 0 : i64, scratch_operands = 0 : i64, tpu.core_type = #tpu.core_type<tc>, window_params = [{transform_indices = @transform_0, window_bounds = array<i64: 1, 135, 512>}, {pipeline_mode = #tpu.pipeline_mode<synchronous>, transform_indices = @transform_1, window_bounds = array<i64: 5, 135>}, {pipeline_mode = #tpu.pipeline_mode<synchronous>, transform_indices = @transform_2, window_bounds = array<i64: 5, 1>}, {transform_indices = @transform_3, window_bounds = array<i64: 1, 5, 512>}]} {
    %c0 = arith.constant 0 : index
    %c0_0 = arith.constant 0 : index
    %0 = vector.load %arg3[%c0, %c0_0] : memref<5x135xf32, #tpu.memory_space<vmem>>, vector<5x135xf32>
    %c0_1 = arith.constant 0 : index
    %c0_2 = arith.constant 0 : index
    %c0_3 = arith.constant 0 : index
    %1 = vector.load %arg2[%c0_1, %c0_2, %c0_3] : memref<1x135x512xf32, #tpu.memory_space<vmem>>, vector<1x135x512xf32>
    %2 = vector.shape_cast %1 : vector<1x135x512xf32> to vector<135x512xf32>
    %cst = arith.constant dense<0.000000e+00> : vector<5x512xf32>
    %3 = tpu.matmul %0, %2, %cst {dimension_numbers = #tpu.dot_dimension_numbers<[1], [0], [0], [1], [0, 0, 1, 1], [], []>} : vector<5x135xf32>, vector<135x512xf32>, vector<5x512xf32> -> vector<5x512xf32>
    %c0_4 = arith.constant 0 : index
    %c0_5 = arith.constant 0 : index
    %4 = vector.load %arg4[%c0_4, %c0_5] : memref<5x1xf32, #tpu.memory_space<vmem>>, vector<5x1xf32>
    %5 = vector.broadcast %4 : vector<5x1xf32> to vector<5x512xf32>
    %6 = arith.addf %3, %5 : vector<5x512xf32>
    %7 = arith.negf %6 : vector<5x512xf32>
    %8 = math.exp %7 : vector<5x512xf32>
    %cst_6 = arith.constant 1.000000e+00 : f32
    %9 = vector.broadcast %cst_6 : f32 to vector<5x512xf32>
    %10 = arith.addf %9, %8 : vector<5x512xf32>
    %11 = arith.divf %9, %10 : vector<5x512xf32>
    %c0_7 = arith.constant 0 : index
    %c0_8 = arith.constant 0 : index
    %c0_9 = arith.constant 0 : index
    %12 = vector.load %arg5[%c0_7, %c0_8, %c0_9] : memref<1x5x512xf32, #tpu.memory_space<vmem>>, vector<1x5x512xf32>
    %13 = vector.shape_cast %12 : vector<1x5x512xf32> to vector<5x512xf32>
    %14 = vector.shape_cast %11 : vector<5x512xf32> to vector<1x5x512xf32>
    tpu.vector_store %arg5[%c0_7, %c0_8, %c0_9], %14 {strides = array<i32>} : memref<1x5x512xf32, #tpu.memory_space<vmem>>, vector<1x5x512xf32>,
    return
  }
  func.func @transform_0(%arg0: i32, %arg1: i32) -> (i32, i32, i32) {
    %c0_i32 = arith.constant 0 : i32
    %c0_i32_0 = arith.constant 0 : i32
    return %arg0, %c0_i32, %arg1 : i32, i32, i32
  }
  func.func @transform_1(%arg0: i32, %arg1: i32) -> (i32, i32) {
    %c0_i32 = arith.constant 0 : i32
    %c0_i32_0 = arith.constant 0 : i32
    %c0_i32_1 = arith.constant 0 : i32
    return %c0_i32, %c0_i32_0 : i32, i32
  }
  func.func @transform_2(%arg0: i32, %arg1: i32) -> (i32, i32) {
    %c0_i32 = arith.constant 0 : i32
    %c0_i32_0 = arith.constant 0 : i32
    %c0_i32_1 = arith.constant 0 : i32
    return %c0_i32, %c0_i32_0 : i32, i32
  }
  func.func @transform_3(%arg0: i32, %arg1: i32) -> (i32, i32, i32) {
    %c0_i32 = arith.constant 0 : i32
    %c0_i32_0 = arith.constant 0 : i32
    return %arg0, %c0_i32, %arg1 : i32, i32, i32
  }
}

</mosaic_0001>

<llo_original>
// kernel: conv3d_sigmoid.1
$region0: #{conv3d_sigmoid.1}
  #allocation0 [shape = 'u32[]', space=smem, size = 0x4, offset = 0x4, fixed_abs, tag = 'smem constant byte address 0x4 - core index']
  #allocation1 [shape = 'u32[144,128]{1,0:T(1,128)}', space=vmem, size = 0x12000, scoped, tag = 'internal scratch']
  %s0 = inlined_call_operand.vmem [shape: f32[1,135,512], index: 0, kind: input, shape index: {}]
  %s1 = inlined_call_operand.vmem [shape: f32[5,135], index: 1, kind: input, shape index: {}]
  %s2 = inlined_call_operand.vmem [shape: f32[5,1], index: 2, kind: input, shape index: {}]
  %s3 = inlined_call_operand.vmem [shape: f32[1,5,512], index: 3, kind: output, shape index: {}]
  %s4 = sld [smem:[#allocation0]]
  $region22: #{conv3d_sigmoid.1} parent=0
    _
  %s6 = ssub.s32 1, %s4
  %s7 = scalar_select 0, %s6, %s4
  // Predicated region
  $region2: #{conv3d_sigmoid.1} parent=0 // pred_check
    _
  $region3: #{conv3d_sigmoid.1} parent=0 // pred_check_branch
    %9 = sbr.rel (0) target = $region5
  $region4: #{conv3d_sigmoid.1} parent=0 // pred_region
    _
  $region5: #{conv3d_sigmoid.1} parent=0 // pred_fallthru
    _
  // Predicated region
  $region6: #{conv3d_sigmoid.1} parent=0 // pred_check
    _
  $region7: #{conv3d_sigmoid.1} parent=0 // pred_check_branch
    %11 = sbr.rel (0) target = $region9
  $region8: #{conv3d_sigmoid.1} parent=0 // pred_region
    _
  $region9: #{conv3d_sigmoid.1} parent=0 // pred_fallthru
    _
  // Predicated region
  $region10: #{conv3d_sigmoid.1} parent=0 // pred_check
    _
  $region11: #{conv3d_sigmoid.1} parent=0 // pred_check_branch
    %13 = sbr.rel (0) target = $region13
  $region12: #{conv3d_sigmoid.1} parent=0 // pred_region
    _
  $region13: #{conv3d_sigmoid.1} parent=0 // pred_fallthru
    _
  %v14 = vld [vmem:[%s1] sm:$0x1f]
  %v15 = vld [vmem:[%s1 + $0x8] sm:$0x1f]
  %v16 = vld [vmem:[%s0] sm:$0xff]
  %v17 = vld [vmem:[%s0 + $0x8] sm:$0xff]
  %v18 = vld [vmem:[%s0 + $0x10] sm:$0xff]
  %v19 = vld [vmem:[%s0 + $0x18] sm:$0xff]
  %v20 = vld [vmem:[%s0 + $0x20] sm:$0xff]
  %v21 = vld [vmem:[%s0 + $0x28] sm:$0xff]
  %v22 = vld [vmem:[%s0 + $0x30] sm:$0xff]
  %v23 = vld [vmem:[%s0 + $0x38] sm:$0xff]
  %v24 = vld [vmem:[%s0 + $0x40] sm:$0xff]
  %v25 = vld [vmem:[%s0 + $0x48] sm:$0xff]
  %v26 = vld [vmem:[%s0 + $0x50] sm:$0xff]
  %v27 = vld [vmem:[%s0 + $0x58] sm:$0xff]
  %v28 = vld [vmem:[%s0 + $0x60] sm:$0xff]
  %v29 = vld [vmem:[%s0 + $0x68] sm:$0xff]
  %v30 = vld [vmem:[%s0 + $0x70] sm:$0xff]
  %v31 = vld [vmem:[%s0 + $0x78] sm:$0xff]
  %v32 = vld [vmem:[%s0 + $0x80] sm:$0xff]
  %v33 = vld [vmem:[%s0 + $0x88] sm:$0xff]
  %v34 = vld [vmem:[%s0 + $0x90] sm:$0xff]
  %v35 = vld [vmem:[%s0 + $0x98] sm:$0xff]
  %v36 = vld [vmem:[%s0 + $0xa0] sm:$0xff]
  %v37 = vld [vmem:[%s0 + $0xa8] sm:$0xff]
  %v38 = vld [vmem:[%s0 + $0xb0] sm:$0xff]
  %v39 = vld [vmem:[%s0 + $0xb8] sm:$0xff]
  %v40 = vld [vmem:[%s0 + $0xc0] sm:$0xff]
  %v41 = vld [vmem:[%s0 + $0xc8] sm:$0xff]
  %v42 = vld [vmem:[%s0 + $0xd0] sm:$0xff]
  %v43 = vld [vmem:[%s0 + $0xd8] sm:$0xff]
  %v44 = vld [vmem:[%s0 + $0xe0] sm:$0xff]
  %v45 = vld [vmem:[%s0 + $0xe8] sm:$0xff]
  %v46 = vld [vmem:[%s0 + $0xf0] sm:$0xff]
  %v47 = vld [vmem:[%s0 + $0xf8] sm:$0xff]
  %v48 = vld [vmem:[%s0 + $0x100] sm:$0xff]
  %v49 = vld [vmem:[%s0 + $0x108] sm:$0xff]
  %v50 = vld [vmem:[%s0 + $0x110] sm:$0xff]
  %v51 = vld [vmem:[%s0 + $0x118] sm:$0xff]
  %v52 = vld [vmem:[%s0 + $0x120] sm:$0xff]
  %v53 = vld [vmem:[%s0 + $0x128] sm:$0xff]
  %v54 = vld [vmem:[%s0 + $0x130] sm:$0xff]
  %v55 = vld [vmem:[%s0 + $0x138] sm:$0xff]
  %v56 = vld [vmem:[%s0 + $0x140] sm:$0xff]
  %v57 = vld [vmem:[%s0 + $0x148] sm:$0xff]
  %v58 = vld [vmem:[%s0 + $0x150] sm:$0xff]
  %v59 = vld [vmem:[%s0 + $0x158] sm:$0xff]
  %v60 = vld [vmem:[%s0 + $0x160] sm:$0xff]
  %v61 = vld [vmem:[%s0 + $0x168] sm:$0xff]
  %v62 = vld [vmem:[%s0 + $0x170] sm:$0xff]
  %v63 = vld [vmem:[%s0 + $0x178] sm:$0xff]
  %v64 = vld [vmem:[%s0 + $0x180] sm:$0xff]
  %v65 = vld [vmem:[%s0 + $0x188] sm:$0xff]
  %v66 = vld [vmem:[%s0 + $0x190] sm:$0xff]
  %v67 = vld [vmem:[%s0 + $0x198] sm:$0xff]
  %v68 = vld [vmem:[%s0 + $0x1a0] sm:$0xff]
  %v69 = vld [vmem:[%s0 + $0x1a8] sm:$0xff]
  %v70 = vld [vmem:[%s0 + $0x1b0] sm:$0xff]
  %v71 = vld [vmem:[%s0 + $0x1b8] sm:$0xff]
  %v72 = vld [vmem:[%s0 + $0x1c0] sm:$0xff]
  %v73 = vld [vmem:[%s0 + $0x1c8] sm:$0xff]
  %v74 = vld [vmem:[%s0 + $0x1d0] sm:$0xff]
  %v75 = vld [vmem:[%s0 + $0x1d8] sm:$0xff]
  %v76 = vld [vmem:[%s0 + $0x1e0] sm:$0xff]
  %v77 = vld [vmem:[%s0 + $0x1e8] sm:$0xff]
  %v78 = vld [vmem:[%s0 + $0x1f0] sm:$0xff]
  %v79 = vld [vmem:[%s0 + $0x1f8] sm:$0xff]
  %v80 = vld [vmem:[%s0 + $0x200] sm:$0x7f]
  %v81 = vld [vmem:[%s0 + $0x208] sm:$0x7f]
  %v82 = vld [vmem:[%s0 + $0x210] sm:$0x7f]
  %v83 = vld [vmem:[%s0 + $0x218] sm:$0x7f]
  %v84 = vld [vmem:[%s2] sm:$0x1f]
  %86 = vset.pattern.permute.xlu0 0
  %87 = vperm.xlu0 %86, %v84
  %v88 = vpop.permute.xlu0 %87
  %vm90 = vcmask 56320
  %v92 = vsel %vm90, %v15, 0
  %vm94 = vcmask 1046528
  %v96 = vsel %vm94, %v80, 0
  %v99 = vsel %vm94, %v81, 0
  %v102 = vsel %vm94, %v82, 0
  %v105 = vsel %vm94, %v83, 0
  %107 = vmatprep.subr.mxu0 %v17
  %108 = vmatpush1.msra.mxu0 %v16
  %109 = vmatprep.subr.mxu0 %v21
  %110 = vmatpush1.msra.mxu0 %v20
  %111 = vmatprep.subr.mxu0 %v25
  %112 = vmatpush1.msra.mxu0 %v24
  %113 = vmatprep.subr.mxu0 %v29
  %114 = vmatpush1.msra.mxu0 %v28
  %115 = vmatprep.subr.mxu0 %v33
  %116 = vmatpush1.msra.mxu0 %v32
  %117 = vmatprep.subr.mxu0 %v37
  %118 = vmatpush1.msra.mxu0 %v36
  %119 = vmatprep.subr.mxu0 %v41
  %120 = vmatpush1.msra.mxu0 %v40
  %121 = vmatprep.subr.mxu0 %v45
  %122 = vmatpush1.msra.mxu0 %v44
  %123 = vmatprep.subr.mxu0 %v49
  %124 = vmatpush1.msra.mxu0 %v48
  %125 = vmatprep.subr.mxu0 %v53
  %126 = vmatpush1.msra.mxu0 %v52
  %127 = vmatprep.subr.mxu0 %v57
  %128 = vmatpush1.msra.mxu0 %v56
  %129 = vmatprep.subr.mxu0 %v61
  %130 = vmatpush1.msra.mxu0 %v60
  %131 = vmatprep.subr.mxu0 %v65
  %132 = vmatpush1.msra.mxu0 %v64
  %133 = vmatprep.subr.mxu0 %v69
  %134 = vmatpush1.msra.mxu0 %v68
  %135 = vmatprep.subr.mxu0 %v73
  %136 = vmatpush1.msra.mxu0 %v72
  %137 = vmatprep.subr.mxu0 %v77
  %138 = vmatpush1.msra.mxu0 %v76
  %139 = vmatprep.subr.mxu0 %v99
  %140 = vmatpush1.msra.mxu0 %v96
  %141 = vmatprep.subr.mxu0 0.0
  %142 = vmatpush1.msra.mxu0 0.0
  %143 = vmatprep.subr.mxu0 0.0
  %144 = vmatpush1.msra.mxu0 0.0
  %145 = vmatprep.subr.mxu0 0.0
  %146 = vmatpush1.msra.mxu0 0.0
  %147 = vmatprep.subr.mxu0 0.0
  %148 = vmatpush1.msra.mxu0 0.0
  %149 = vmatprep.subr.mxu0 0.0
  %150 = vmatpush1.msra.mxu0 0.0
  %151 = vmatprep.subr.mxu0 0.0
  %152 = vmatpush1.msra.mxu0 0.0
  %153 = vmatprep.subr.mxu0 0.0
  %154 = vmatpush1.msra.mxu0 0.0
  %155 = vmatprep.subr.mxu0 0.0
  %156 = vmatpush1.msra.mxu0 0.0
  %157 = vmatprep.subr.mxu0 0.0
  %158 = vmatpush1.msra.mxu0 0.0
  %159 = vmatprep.subr.mxu0 0.0
  %160 = vmatpush1.msra.mxu0 0.0
  %161 = vmatprep.subr.mxu0 0.0
  %162 = vmatpush1.msra.mxu0 0.0
  %163 = vmatprep.subr.mxu0 0.0
  %164 = vmatpush1.msra.mxu0 0.0
  %165 = vmatprep.subr.mxu0 0.0
  %166 = vmatpush1.msra.mxu0 0.0
  %167 = vmatprep.subr.mxu0 0.0
  %168 = vmatpush1.msra.mxu0 0.0
  %169 = vmatprep.subr.mxu0 0.0
  %170 = vmatpush1.msra.mxu0 0.0
  %171 = vmatprep.mubr.f32.mxu0 %v92
  %172 = vmatmul.mubr.f32.gmra.mrb[0].mxu0 %v14
  %v173 = vpop.f32.mrb[0].mxu0
  %v174 = vadd.f32 %v88, %v173
  %v175 = vpop.f32.mrb[0].mxu0
  %v176 = vadd.f32 %v88, %v175
  %177 = vdwg.mxu0
  %178 = vmatprep.subr.mxu0 %v19
  %179 = vmatpush1.msra.mxu0 %v18
  %180 = vmatprep.subr.mxu0 %v23
  %181 = vmatpush1.msra.mxu0 %v22
  %182 = vmatprep.subr.mxu0 %v27
  %183 = vmatpush1.msra.mxu0 %v26
  %184 = vmatprep.subr.mxu0 %v31
  %185 = vmatpush1.msra.mxu0 %v30
  %186 = vmatprep.subr.mxu0 %v35
  %187 = vmatpush1.msra.mxu0 %v34
  %188 = vmatprep.subr.mxu0 %v39
  %189 = vmatpush1.msra.mxu0 %v38
  %190 = vmatprep.subr.mxu0 %v43
  %191 = vmatpush1.msra.mxu0 %v42
  %192 = vmatprep.subr.mxu0 %v47
  %193 = vmatpush1.msra.mxu0 %v46
  %194 = vmatprep.subr.mxu0 %v51
  %195 = vmatpush1.msra.mxu0 %v50
  %196 = vmatprep.subr.mxu0 %v55
  %197 = vmatpush1.msra.mxu0 %v54
  %198 = vmatprep.subr.mxu0 %v59
  %199 = vmatpush1.msra.mxu0 %v58
  %200 = vmatprep.subr.mxu0 %v63
  %201 = vmatpush1.msra.mxu0 %v62
  %202 = vmatprep.subr.mxu0 %v67
  %203 = vmatpush1.msra.mxu0 %v66
  %204 = vmatprep.subr.mxu0 %v71
  %205 = vmatpush1.msra.mxu0 %v70
  %206 = vmatprep.subr.mxu0 %v75
  %207 = vmatpush1.msra.mxu0 %v74
  %208 = vmatprep.subr.mxu0 %v79
  %209 = vmatpush1.msra.mxu0 %v78
  %210 = vmatprep.subr.mxu0 %v105
  %211 = vmatpush1.msra.mxu0 %v102
  %212 = vmatprep.subr.mxu0 0.0
  %213 = vmatpush1.msra.mxu0 0.0
  %214 = vmatprep.subr.mxu0 0.0
  %215 = vmatpush1.msra.mxu0 0.0
  %216 = vmatprep.subr.mxu0 0.0
  %217 = vmatpush1.msra.mxu0 0.0
  %218 = vmatprep.subr.mxu0 0.0
  %219 = vmatpush1.msra.mxu0 0.0
  %220 = vmatprep.subr.mxu0 0.0
  %221 = vmatpush1.msra.mxu0 0.0
  %222 = vmatprep.subr.mxu0 0.0
  %223 = vmatpush1.msra.mxu0 0.0
  %224 = vmatprep.subr.mxu0 0.0
  %225 = vmatpush1.msra.mxu0 0.0
  %226 = vmatprep.subr.mxu0 0.0
  %227 = vmatpush1.msra.mxu0 0.0
  %228 = vmatprep.subr.mxu0 0.0
  %229 = vmatpush1.msra.mxu0 0.0
  %230 = vmatprep.subr.mxu0 0.0
  %231 = vmatpush1.msra.mxu0 0.0
  %232 = vmatprep.subr.mxu0 0.0
  %233 = vmatpush1.msra.mxu0 0.0
  %234 = vmatprep.subr.mxu0 0.0
  %235 = vmatpush1.msra.mxu0 0.0
  %236 = vmatprep.subr.mxu0 0.0
  %237 = vmatpush1.msra.mxu0 0.0
  %238 = vmatprep.subr.mxu0 0.0
  %239 = vmatpush1.msra.mxu0 0.0
  %240 = vmatprep.subr.mxu0 0.0
  %241 = vmatpush1.msra.mxu0 0.0
  %242 = vmatprep.mubr.f32.mxu0 %v92
  %243 = vmatmul.mubr.f32.gmra.mrb[0].mxu0 %v14
  %v244 = vpop.f32.mrb[0].mxu0
  %v245 = vadd.f32 %v88, %v244
  %v246 = vpop.f32.mrb[0].mxu0
  %v247 = vadd.f32 %v88, %v246
  %248 = vdwg.mxu0
  %v249 = vxor.u32 %v174, 2147483648
  %v250 = vxor.u32 %v176, 2147483648
  %v251 = vxor.u32 %v245, 2147483648
  %v252 = vxor.u32 %v247, 2147483648
  %v253 = vmul.f32 %v249, 1.442695
  %v254 = vpow.pop %v253
  %v255 = vmul.f32 %v250, 1.442695
  %v256 = vpow.pop %v255
  %v257 = vmul.f32 %v251, 1.442695
  %v258 = vpow.pop %v257
  %v259 = vmul.f32 %v252, 1.442695
  %v260 = vpow.pop %v259
  %v261 = vadd.f32 %v254, 1.0
  %v262 = vadd.f32 %v256, 1.0
  %v263 = vadd.f32 %v258, 1.0
  %v264 = vadd.f32 %v260, 1.0
  %v265 = vrcp.pop %v261
  %v266 = vmul.f32 1.0, %v265
  %v267 = vrcp.pop %v262
  %v268 = vmul.f32 1.0, %v267
  %v269 = vrcp.pop %v263
  %v270 = vmul.f32 1.0, %v269
  %v271 = vrcp.pop %v264
  %v272 = vmul.f32 1.0, %v271
  %273 = vst [vmem:[%s3] sm:$0x1f] %v266
  %274 = vst [vmem:[%s3 + $0x8] sm:$0x1f] %v268
  %275 = vst [vmem:[%s3 + $0x10] sm:$0x1f] %v270
  %276 = vst [vmem:[%s3 + $0x18] sm:$0x1f] %v272
  // Predicated region
  $region14: #{conv3d_sigmoid.1} parent=0 // pred_check
    _
  $region15: #{conv3d_sigmoid.1} parent=0 // pred_check_branch
    %278 = sbr.rel (0) target = $region17
  $region16: #{conv3d_sigmoid.1} parent=0 // pred_region
    _
  $region17: #{conv3d_sigmoid.1} parent=0 // pred_fallthru
    _
  // Predicated region
  $region18: #{conv3d_sigmoid.1} parent=0 // pred_check
    _
  $region19: #{conv3d_sigmoid.1} parent=0 // pred_check_branch
    %280 = sbr.rel (0) target = $region21
  $region20: #{conv3d_sigmoid.1} parent=0 // pred_region
    _
  $region21: #{conv3d_sigmoid.1} parent=0 // pred_fallthru
    _

</llo_original>
